<compile_context>
chip_gen: v6e
topology: v6e:2x2x1
jax: 0.10.0
libtpu: 0.0.40
codegen_flags: <defaults>
</compile_context>

<pallas_src>
import jax
import jax.numpy as jnp
from jax.experimental import pallas as pl
from jax.experimental.pallas import tpu as pltpu


def _broadcast_kernel(x_ref, o_ref):
    # x_ref: (1, t) gray channel tile; o_ref: (3, t). Read once, write 3 rows.
    o_ref[...] = jnp.broadcast_to(x_ref[...], o_ref.shape)


def _drop_alpha_kernel(x_ref, o_ref):
    # x_ref: (4, t) RGBA tile; o_ref: (3, t). Keep first three channels.
    o_ref[...] = x_ref[0:3, :]


def _tile_size(n, rows, itemsize):
    """Lane-dense tile along the flattened H*W axis."""
    if n % 128 != 0:
        # Must use the full extent when the last dim is not 128-divisible.
        return n
    # ~2 MiB per block (x2 double-buffered in + out still << 64 MiB on v7x).
    target_bytes = 2 * 1024 * 1024
    t = max(128, (target_bytes // (rows * itemsize)) // 128 * 128)
    return min(t, n)


def to_three_channels(image):
    """Pallas implementation of ToThreeChannels.forward for a CHW image."""
    C, H, W = image.shape

    if C not in (1, 4):
        # Identity: pure alias, zero HBM traffic, no kernel launch.
        return image

    N = H * W
    x = image.reshape(C, N)  # lane-dense view: pixels on the lane axis
    itemsize = jnp.dtype(image.dtype).itemsize
    t = _tile_size(N, 4, itemsize)
    grid = (pl.cdiv(N, t),)

    if C == 1:
        kernel = _broadcast_kernel
        in_block = (1, t)   # second-to-last dim == full input channel dim
    else:  # C == 4
        kernel = _drop_alpha_kernel
        in_block = (4, t)   # full channel dim; slice to 3 inside the kernel

    out2d = pl.pallas_call(
        kernel,
        out_shape=jax.ShapeDtypeStruct((3, N), image.dtype),
        grid=grid,
        in_specs=[pl.BlockSpec(in_block, lambda i: (0, i))],
        out_specs=pl.BlockSpec((3, t), lambda i: (0, i)),
        compiler_params=pltpu.CompilerParams(
            dimension_semantics=("parallel",)
        ),
    )(x)
    return out2d.reshape(3, H, W)


def _reference(image):
    # Pure-JAX reference mirroring the PyTorch module.
    C = image.shape[0]
    if C == 1:
        return jnp.tile(image, (3, 1, 1))
    elif C == 4:
        return image[:3]
    else:
        return image


if __name__ == "__main__":
    key = jax.random.PRNGKey(0)
    k1, k3, k4 = jax.random.split(key, 3)
    H, W = 16, 16

    img_gray = jax.random.normal(k1, (1, H, W), dtype=jnp.float32)   # C == 1
    img_rgb = jax.random.normal(k3, (3, H, W), dtype=jnp.float32)    # identity
    img_rgba = jax.random.normal(k4, (4, H, W), dtype=jnp.float32)   # C == 4

    ok = True
    for img in (img_gray, img_rgb, img_rgba):
        out = jax.block_until_ready(to_three_channels(img))
        ref = _reference(img)
        if out.shape != ref.shape or out.dtype != ref.dtype:
            ok = False
        if not bool(jnp.array_equal(out, ref)):
            ok = False

    if ok:
        print("KERNEL_OK")
    else:
        print("KERNEL_MISMATCH")
</pallas_src>

<mosaic_0001>
module attributes {stable_mosaic.version = 11 : i64} {
  func.func @_broadcast_kernel(%arg0: i32, %arg1: memref<1x256xf32, #tpu.memory_space<vmem>>, %arg2: memref<3x256xf32, #tpu.memory_space<vmem>>) attributes {dimension_semantics = [#tpu.dimension_semantics<parallel>], iteration_bounds = array<i64: 1>, scalar_prefetch = 0 : i64, scratch_operands = 0 : i64, tpu.core_type = #tpu.core_type<tc>, window_params = [{transform_indices = @transform_0, window_bounds = array<i64: 1, 256>}, {transform_indices = @transform_1, window_bounds = array<i64: 3, 256>}]} {
    %c0 = arith.constant 0 : index
    %c0_0 = arith.constant 0 : index
    %0 = vector.load %arg1[%c0, %c0_0] : memref<1x256xf32, #tpu.memory_space<vmem>>, vector<1x256xf32>
    %1 = vector.shape_cast %0 : vector<1x256xf32> to vector<1x256xf32>
    %2 = vector.broadcast %1 : vector<1x256xf32> to vector<3x256xf32>
    %c0_1 = arith.constant 0 : index
    %c0_2 = arith.constant 0 : index
    %3 = vector.load %arg2[%c0_1, %c0_2] : memref<3x256xf32, #tpu.memory_space<vmem>>, vector<3x256xf32>
    tpu.vector_store %arg2[%c0_1, %c0_2], %2 {strides = array<i32>} : memref<3x256xf32, #tpu.memory_space<vmem>>, vector<3x256xf32>,
    return
  }
  func.func @transform_0(%arg0: i32) -> (i32, i32) {
    %c0_i32 = arith.constant 0 : i32
    %c0_i32_0 = arith.constant 0 : i32
    return %c0_i32, %arg0 : i32, i32
  }
  func.func @transform_1(%arg0: i32) -> (i32, i32) {
    %c0_i32 = arith.constant 0 : i32
    %c0_i32_0 = arith.constant 0 : i32
    return %c0_i32, %arg0 : i32, i32
  }
}

</mosaic_0001>

<llo_original>
// kernel: tpu_custom_call.1
$region0: #{tpu_custom_call.1}
  #allocation0 [shape = 'u32[]', space=smem, size = 0x4, offset = 0x4, fixed_abs, tag = 'smem constant byte address 0x4 - core index']
  #allocation1 [shape = 'u32[144,128]{1,0:T(1,128)}', space=vmem, size = 0x12000, scoped, tag = 'internal scratch']
  %s0 = inlined_call_operand.hbm [shape: f32[1,256], index: 0, kind: input, shape index: {}]
  %s1 = inlined_call_operand.hbm [shape: f32[3,256], index: 1, kind: output, shape index: {}]
  %s2 = sld [smem:[#allocation0]]
  $region18: #{tpu_custom_call.1} parent=0
    _
  %s4 = ssub.s32 1, %s2
  %s5 = scalar_select 0, %s4, %s2
  $region1: #{tpu_custom_call.1} parent=0
    #allocation2 [shape = 'u8[1024]{0}', space=vmem, size = 0x400, scoped, tag = 'input window, operand 0, single buffered']
    #allocation3 [shape = 's32[1]{0}', space=sflag, size = 0x4, scoped, tag = 'scoped memory for tpu_custom_call.1']
    #allocation4 [shape = 's32[1]{0}', space=sflag, size = 0x4, scoped, tag = 'scoped memory for tpu_custom_call.1']
    #allocation5 [shape = 'u8[4096]{0}', space=vmem, size = 0x1000, scoped, tag = 'output window, operand 0, single buffered']
    %6 = vsyncpa [#allocation3], 0
    %7 = vsyncpa [#allocation4], 0
    // Predicated region
    $region2: #{tpu_custom_call.1} parent=1 // pred_check
      _
    $region3: #{tpu_custom_call.1} parent=1 // pred_check_branch
      %9 = sbr.rel (0) target = $region5
    $region4: #{tpu_custom_call.1} parent=1 // pred_region
      %s11 = ssub.s32 32, 32
      %12 = vsyncadd [#allocation3], %s11
      %s14 = sshll.u32 [#allocation2], 4
      %s15 = int_to_ptr.vmem [resolvable:$true] %s14
      %17 = dma.hbm_to_vmem [thread:$0]  %s0, 32, %s15, [#allocation3]
    $region5: #{tpu_custom_call.1} parent=1 // pred_fallthru
      _
    // Predicated region
    $region6: #{tpu_custom_call.1} parent=1 // pred_check
      _
    $region7: #{tpu_custom_call.1} parent=1 // pred_check_branch
      %19 = sbr.rel (0) target = $region9
    $region8: #{tpu_custom_call.1} parent=1 // pred_region
      %20 = dma.done [#allocation3], 32
    $region9: #{tpu_custom_call.1} parent=1 // pred_fallthru
      _
    %v21 = vld [vmem:[#allocation2] sm:$0x3]
    %v23 = vlaneseq
    %v24 = vshrl.u32 %v23, 7
    %v25 = vsub.s32 0, %v24
    %v26 = vrot.slane %v21, %v25
    %v27 = vlaneseq
    %v28 = vshrl.u32 %v27, 7
    %v29 = vsub.s32 1, %v28
    %v30 = vrot.slane %v21, %v29
    %v31 = vcombine.low %v26, %v30
    %33 = vst [vmem:[#allocation5] sm:$0x77] %v31
    // Predicated region
    $region10: #{tpu_custom_call.1} parent=1 // pred_check
      _
    $region11: #{tpu_custom_call.1} parent=1 // pred_check_branch
      %35 = sbr.rel (0) target = $region13
    $region12: #{tpu_custom_call.1} parent=1 // pred_region
      %s37 = ssub.s32 128, 128
      %38 = vsyncadd [#allocation4], %s37
      %s40 = sshll.u32 [#allocation5], 4
      %s41 = int_to_ptr.vmem [resolvable:$true] %s40
      %43 = dma.vmem_to_hbm [thread:$0]  %s41, 128, %s1, [#allocation4]
    $region13: #{tpu_custom_call.1} parent=1 // pred_fallthru
      _
    // Predicated region
    $region14: #{tpu_custom_call.1} parent=1 // pred_check
      _
    $region15: #{tpu_custom_call.1} parent=1 // pred_check_branch
      %45 = sbr.rel (0) target = $region17
    $region16: #{tpu_custom_call.1} parent=1 // pred_region
      %46 = dma.done [#allocation4], 128
    $region17: #{tpu_custom_call.1} parent=1 // pred_fallthru
      _
    %47 = vsyncpa [#allocation3], 1
    %48 = vsyncpa [#allocation4], 1

</llo_original>
